<compile_context>
chip_gen: v7x
topology: tpu7x:2x2x1
jax: 0.10.0
libtpu: 0.0.40
codegen_flags: <defaults>
</compile_context>

<pallas_src>
import functools

import jax
import jax.numpy as jnp
from jax.experimental import pallas as pl
from jax.experimental.pallas import tpu as pltpu


def _round_up(x: int, m: int) -> int:
    return ((x + m - 1) // m) * m


def linear_kernel(x_ref, w_ref, b_ref, o_ref, acc_ref):
    # x_ref: (TM, TK), w_ref: (TK, TN), b_ref: (1, TN),
    # o_ref: (TM, TN), acc_ref: (TM, TN) f32
    k = pl.program_id(2)

    @pl.when(k == 0)
    def _():
        # Seed the accumulator with the bias (sublane broadcast of a (1, TN) row).
        acc_ref[...] = jnp.broadcast_to(b_ref[...], acc_ref.shape).astype(jnp.float32)

    acc_ref[...] += jnp.dot(
        x_ref[...], w_ref[...], preferred_element_type=jnp.float32
    )

    @pl.when(k == pl.num_programs(2) - 1)
    def _():
        o_ref[...] = acc_ref[...].astype(o_ref.dtype)


@functools.partial(jax.jit, static_argnames=("tm", "tn", "tk"))
def linear_forward(x, weight_t, bias, *, tm: int = 256, tn: int = 512, tk: int = 512):
    """y = x @ weight_t + bias  (nn.Linear forward).

    x:        [B, D_in]      float32
    weight_t: [D_in, D_out]  float32 (transpose of nn.Linear.weight)
    bias:     [D_out]        float32
    returns:  [B, D_out]     float32
    """
    B, D_in = x.shape
    D_out = weight_t.shape[1]

    # --- pad to TPU-friendly, lane-dense shapes (zero pads don't change y) ---
    d_in_p = _round_up(D_in, 128)
    TK = min(tk, d_in_p)
    d_in_p = _round_up(d_in_p, TK)          # divisible by TK

    d_out_p = _round_up(D_out, 128)
    TN = min(tn, d_out_p)                   # TN is a multiple of 128
    d_out_p = _round_up(d_out_p, TN)        # divisible by TN

    TM = min(tm, _round_up(B, 8))
    b_p = _round_up(B, TM)

    x_p = jnp.pad(x, ((0, b_p - B), (0, d_in_p - D_in)))
    w_p = jnp.pad(weight_t, ((0, d_in_p - D_in), (0, d_out_p - D_out)))
    bias_p = jnp.pad(bias, (0, d_out_p - D_out)).reshape(1, d_out_p)

    grid = (b_p // TM, d_out_p // TN, d_in_p // TK)

    cost = pl.CostEstimate(
        flops=2 * b_p * d_in_p * d_out_p,
        transcendentals=0,
        bytes_accessed=4 * (b_p * d_in_p + d_in_p * d_out_p + b_p * d_out_p),
    )

    out_p = pl.pallas_call(
        linear_kernel,
        out_shape=jax.ShapeDtypeStruct((b_p, d_out_p), x.dtype),
        grid_spec=pltpu.PrefetchScalarGridSpec(
            num_scalar_prefetch=0,
            grid=grid,
            in_specs=[
                pl.BlockSpec((TM, TK), lambda i, j, k: (i, k)),   # x tile
                pl.BlockSpec((TK, TN), lambda i, j, k: (k, j)),   # weight tile
                pl.BlockSpec((1, TN), lambda i, j, k: (0, j)),    # bias tile
            ],
            out_specs=pl.BlockSpec((TM, TN), lambda i, j, k: (i, j)),
            scratch_shapes=[pltpu.VMEM((TM, TN), jnp.float32)],
        ),
        compiler_params=pltpu.CompilerParams(
            # batch and output-tile axes parallel (megacore), reduction arbitrary.
            dimension_semantics=("parallel", "parallel", "arbitrary"),
            # stay well inside v7x's scoped-VMEM budget.
            vmem_limit_bytes=32 * 1024 * 1024,
        ),
        cost_estimate=cost,
    )(x_p, w_p, bias_p)

    return out_p[:B, :D_out]


if __name__ == "__main__":
    # LinearRegressionModel(input_dim, output_dim) -> single nn.Linear with bias.
    batch, input_dim, output_dim = 8, 32, 16

    key = jax.random.PRNGKey(0)
    kx, kw, kb = jax.random.split(key, 3)

    x = jax.random.normal(kx, (batch, input_dim), dtype=jnp.float32)

    # Mimic nn.Linear init: uniform(-1/sqrt(fan_in), 1/sqrt(fan_in)).
    bound = 1.0 / jnp.sqrt(jnp.float32(input_dim))
    # PyTorch weight shape is [output_dim, input_dim]; kernel uses its transpose.
    weight = jax.random.uniform(
        kw, (output_dim, input_dim), minval=-bound, maxval=bound, dtype=jnp.float32
    )
    bias = jax.random.uniform(
        kb, (output_dim,), minval=-bound, maxval=bound, dtype=jnp.float32
    )
    weight_t = weight.T

    out = linear_forward(x, weight_t, bias)
    out = jax.block_until_ready(out)

    # Reference check against plain JAX.
    ref = x @ weight_t + bias
    assert out.shape == (batch, output_dim)
    assert jnp.allclose(out, ref, atol=1e-5, rtol=1e-5)

    print("KERNEL_OK")
</pallas_src>

<mosaic_0001>
module attributes {stable_mosaic.version = 11 : i64} {
  func.func @linear_kernel(%arg0: i32, %arg1: i32, %arg2: i32, %arg3: memref<8x128xf32, #tpu.memory_space<vmem>>, %arg4: memref<128x128xf32, #tpu.memory_space<vmem>>, %arg5: memref<1x128xf32, #tpu.memory_space<vmem>>, %arg6: memref<8x128xf32, #tpu.memory_space<vmem>>, %arg7: memref<8x128xf32, #tpu.memory_space<vmem>>) attributes {dimension_semantics = [#tpu.dimension_semantics<parallel>, #tpu.dimension_semantics<parallel>, #tpu.dimension_semantics<arbitrary>], iteration_bounds = array<i64: 1, 1, 1>, scalar_prefetch = 0 : i64, scratch_operands = 1 : i64, tpu.core_type = #tpu.core_type<tc>, window_params = [{transform_indices = @transform_0, window_bounds = array<i64: 8, 128>}, {transform_indices = @transform_1, window_bounds = array<i64: 128, 128>}, {transform_indices = @transform_2, window_bounds = array<i64: 1, 128>}, {transform_indices = @transform_3, window_bounds = array<i64: 8, 128>}]} {
    %c0_i32 = arith.constant 0 : i32
    %0 = arith.cmpi eq, %arg2, %c0_i32 : i32
    %1 = arith.extui %0 : i1 to i32
    %c0_i32_0 = arith.constant 0 : i32
    %2 = arith.cmpi ne, %1, %c0_i32_0 : i32
    scf.if %2 {
      %c0_10 = arith.constant 0 : index
      %c0_11 = arith.constant 0 : index
      %12 = vector.load %arg5[%c0_10, %c0_11] : memref<1x128xf32, #tpu.memory_space<vmem>>, vector<1x128xf32>
      %13 = vector.shape_cast %12 : vector<1x128xf32> to vector<1x128xf32>
      %14 = vector.broadcast %13 : vector<1x128xf32> to vector<8x128xf32>
      %c0_12 = arith.constant 0 : index
      %c0_13 = arith.constant 0 : index
      %15 = vector.load %arg7[%c0_12, %c0_13] : memref<8x128xf32, #tpu.memory_space<vmem>>, vector<8x128xf32>
      tpu.vector_store %arg7[%c0_12, %c0_13], %14 {strides = array<i32>} : memref<8x128xf32, #tpu.memory_space<vmem>>, vector<8x128xf32>,
    } else {
    }
    %c0 = arith.constant 0 : index
    %c0_1 = arith.constant 0 : index
    %3 = vector.load %arg7[%c0, %c0_1] : memref<8x128xf32, #tpu.memory_space<vmem>>, vector<8x128xf32>
    %c0_2 = arith.constant 0 : index
    %c0_3 = arith.constant 0 : index
    %4 = vector.load %arg3[%c0_2, %c0_3] : memref<8x128xf32, #tpu.memory_space<vmem>>, vector<8x128xf32>
    %c0_4 = arith.constant 0 : index
    %c0_5 = arith.constant 0 : index
    %5 = vector.load %arg4[%c0_4, %c0_5] : memref<128x128xf32, #tpu.memory_space<vmem>>, vector<128x128xf32>
    %cst = arith.constant dense<0.000000e+00> : vector<8x128xf32>
    %6 = tpu.matmul %4, %5, %cst {dimension_numbers = #tpu.dot_dimension_numbers<[1], [0], [0], [1], [0, 0, 1, 1], [], []>} : vector<8x128xf32>, vector<128x128xf32>, vector<8x128xf32> -> vector<8x128xf32>
    %7 = arith.addf %3, %6 : vector<8x128xf32>
    %c0_6 = arith.constant 0 : index
    %c0_7 = arith.constant 0 : index
    %8 = vector.load %arg7[%c0_6, %c0_7] : memref<8x128xf32, #tpu.memory_space<vmem>>, vector<8x128xf32>
    tpu.vector_store %arg7[%c0_6, %c0_7], %7 {strides = array<i32>} : memref<8x128xf32, #tpu.memory_space<vmem>>, vector<8x128xf32>,
    %c0_i32_8 = arith.constant 0 : i32
    %9 = arith.cmpi eq, %arg2, %c0_i32_8 : i32
    %10 = arith.extui %9 : i1 to i32
    %c0_i32_9 = arith.constant 0 : i32
    %11 = arith.cmpi ne, %10, %c0_i32_9 : i32
    scf.if %11 {
      %c0_10 = arith.constant 0 : index
      %c0_11 = arith.constant 0 : index
      %12 = vector.load %arg7[%c0_10, %c0_11] : memref<8x128xf32, #tpu.memory_space<vmem>>, vector<8x128xf32>
      %c0_12 = arith.constant 0 : index
      %c0_13 = arith.constant 0 : index
      %13 = vector.load %arg6[%c0_12, %c0_13] : memref<8x128xf32, #tpu.memory_space<vmem>>, vector<8x128xf32>
      tpu.vector_store %arg6[%c0_12, %c0_13], %12 {strides = array<i32>} : memref<8x128xf32, #tpu.memory_space<vmem>>, vector<8x128xf32>,
    } else {
    }
    return
  }
  func.func @transform_0(%arg0: i32, %arg1: i32, %arg2: i32) -> (i32, i32) {
    %c0_i32 = arith.constant 0 : i32
    return %arg0, %arg2 : i32, i32
  }
  func.func @transform_1(%arg0: i32, %arg1: i32, %arg2: i32) -> (i32, i32) {
    %c0_i32 = arith.constant 0 : i32
    return %arg2, %arg1 : i32, i32
  }
  func.func @transform_2(%arg0: i32, %arg1: i32, %arg2: i32) -> (i32, i32) {
    %c0_i32 = arith.constant 0 : i32
    %c0_i32_0 = arith.constant 0 : i32
    return %c0_i32, %arg1 : i32, i32
  }
  func.func @transform_3(%arg0: i32, %arg1: i32, %arg2: i32) -> (i32, i32) {
    %c0_i32 = arith.constant 0 : i32
    return %arg0, %arg1 : i32, i32
  }
}

</mosaic_0001>

<llo_original>
// kernel: linear_forward.1
$region0: #{linear_forward.1}
  #allocation0 [shape = 'u32[]', space=smem, size = 0x4, offset = 0x4, fixed_abs, tag = 'smem constant byte address 0x4 - core index']
  #allocation1 [shape = 'u32[144,128]{1,0:T(1,128)}', space=vmem, size = 0x12000, scoped, tag = 'internal scratch']
  #allocation2 [shape = 'f32[8,128]{1,0:T(8,128)}', space=vmem, size = 0x1000, scoped, tag = 'scratch operand']
  %s0 = inlined_call_operand.vmem [shape: f32[8,128], index: 0, kind: input, shape index: {}]
  %s1 = inlined_call_operand.vmem [shape: f32[128,128], index: 1, kind: input, shape index: {}]
  %s2 = inlined_call_operand.vmem [shape: f32[1,128], index: 2, kind: input, shape index: {}]
  %s3 = inlined_call_operand.hbm [shape: f32[8,128], index: 3, kind: output, shape index: {}]
  %s4 = sld [smem:[#allocation0]]
  $region30: #{linear_forward.1} parent=0
    _
  %s6 = ssub.s32 1, %s4
  %s7 = scalar_select 0, %s6, %s4
  $region1: #{linear_forward.1} parent=0
    #allocation3 [shape = 'u8[4096]{0}', space=vmem, size = 0x1000, scoped, tag = 'output window, operand 0, single buffered']
    #allocation4 [shape = 's32[1]{0}', space=sflag, size = 0x4, scoped, tag = 'scoped memory for linear_forward.1']
    %8 = vsyncpa [#allocation4], 0
    // Predicated region
    $region2: #{linear_forward.1} parent=1 // pred_check
      _
    $region3: #{linear_forward.1} parent=1 // pred_check_branch
      %10 = sbr.rel (0) target = $region5
    $region4: #{linear_forward.1} parent=1 // pred_region
      _
    $region5: #{linear_forward.1} parent=1 // pred_fallthru
      _
    // Predicated region
    $region6: #{linear_forward.1} parent=1 // pred_check
      _
    $region7: #{linear_forward.1} parent=1 // pred_check_branch
      %12 = sbr.rel (0) target = $region9
    $region8: #{linear_forward.1} parent=1 // pred_region
      _
    $region9: #{linear_forward.1} parent=1 // pred_fallthru
      _
    // Predicated region
    $region10: #{linear_forward.1} parent=1 // pred_check
      _
    $region11: #{linear_forward.1} parent=1 // pred_check_branch
      %14 = sbr.rel (0) target = $region13
    $region12: #{linear_forward.1} parent=1 // pred_region
      _
    $region13: #{linear_forward.1} parent=1 // pred_fallthru
      _
    %p15 = scmp.eq.s32.totalorder 0, 0
    // Predicated region
    $region14: #{linear_forward.1} parent=1 // pred_check
      %p16 = pneg %p15
    $region15: #{linear_forward.1} parent=1 // pred_check_branch
      %18 = sbr.rel (%p16) target = $region17
    $region16: #{linear_forward.1} parent=1 // pred_region
      %v19 = vld [vmem:[%s2] sm:$0x1]
      %v21 = vlaneseq
      %v22 = vshrl.u32 %v21, 7
      %v23 = vsub.s32 0, %v22
      %v24 = vrot.slane %v19, %v23
      %26 = vst [vmem:[#allocation2] sm:$0xff] %v24
    $region17: #{linear_forward.1} parent=1 // pred_fallthru
      _
    %v27 = vld [vmem:[#allocation2] sm:$0xff]
    %v28 = vld [vmem:[%s0] sm:$0xff]
    %v29 = vld [vmem:[%s1] sm:$0xff]
    %v30 = vld [vmem:[%s1 + $0x8] sm:$0xff]
    %v31 = vld [vmem:[%s1 + $0x10] sm:$0xff]
    %v32 = vld [vmem:[%s1 + $0x18] sm:$0xff]
    %v33 = vld [vmem:[%s1 + $0x20] sm:$0xff]
    %v34 = vld [vmem:[%s1 + $0x28] sm:$0xff]
    %v35 = vld [vmem:[%s1 + $0x30] sm:$0xff]
    %v36 = vld [vmem:[%s1 + $0x38] sm:$0xff]
    %v37 = vld [vmem:[%s1 + $0x40] sm:$0xff]
    %v38 = vld [vmem:[%s1 + $0x48] sm:$0xff]
    %v39 = vld [vmem:[%s1 + $0x50] sm:$0xff]
    %v40 = vld [vmem:[%s1 + $0x58] sm:$0xff]
    %v41 = vld [vmem:[%s1 + $0x60] sm:$0xff]
    %v42 = vld [vmem:[%s1 + $0x68] sm:$0xff]
    %v43 = vld [vmem:[%s1 + $0x70] sm:$0xff]
    %v44 = vld [vmem:[%s1 + $0x78] sm:$0xff]
    %45 = vmatprep.subr.mxu0 0.0
    %46 = vmatpush1.msra.mxu0 %v29
    %47 = vmatprep.subr.mxu0 0.0
    %48 = vmatpush1.msra.mxu0 %v30
    %49 = vmatprep.subr.mxu0 0.0
    %50 = vmatpush1.msra.mxu0 %v31
    %51 = vmatprep.subr.mxu0 0.0
    %52 = vmatpush1.msra.mxu0 %v32
    %53 = vmatprep.subr.mxu0 0.0
    %54 = vmatpush1.msra.mxu0 %v33
    %55 = vmatprep.subr.mxu0 0.0
    %56 = vmatpush1.msra.mxu0 %v34
    %57 = vmatprep.subr.mxu0 0.0
    %58 = vmatpush1.msra.mxu0 %v35
    %59 = vmatprep.subr.mxu0 0.0
    %60 = vmatpush1.msra.mxu0 %v36
    %61 = vmatprep.subr.mxu0 0.0
    %62 = vmatpush1.msra.mxu0 %v37
    %63 = vmatprep.subr.mxu0 0.0
    %64 = vmatpush1.msra.mxu0 %v38
    %65 = vmatprep.subr.mxu0 0.0
    %66 = vmatpush1.msra.mxu0 %v39
    %67 = vmatprep.subr.mxu0 0.0
    %68 = vmatpush1.msra.mxu0 %v40
    %69 = vmatprep.subr.mxu0 0.0
    %70 = vmatpush1.msra.mxu0 %v41
    %71 = vmatprep.subr.mxu0 0.0
    %72 = vmatpush1.msra.mxu0 %v42
    %73 = vmatprep.subr.mxu0 0.0
    %74 = vmatpush1.msra.mxu0 %v43
    %75 = vmatprep.subr.mxu0 0.0
    %76 = vmatpush1.msra.mxu0 %v44
    %77 = vmatprep.subr.mxu0 0.0
    %78 = vmatpush1.msra.mxu0 0.0
    %79 = vmatprep.subr.mxu0 0.0
    %80 = vmatpush1.msra.mxu0 0.0
    %81 = vmatprep.subr.mxu0 0.0
    %82 = vmatpush1.msra.mxu0 0.0
    %83 = vmatprep.subr.mxu0 0.0
    %84 = vmatpush1.msra.mxu0 0.0
    %85 = vmatprep.subr.mxu0 0.0
    %86 = vmatpush1.msra.mxu0 0.0
    %87 = vmatprep.subr.mxu0 0.0
    %88 = vmatpush1.msra.mxu0 0.0
    %89 = vmatprep.subr.mxu0 0.0
    %90 = vmatpush1.msra.mxu0 0.0
    %91 = vmatprep.subr.mxu0 0.0
    %92 = vmatpush1.msra.mxu0 0.0
    %93 = vmatprep.subr.mxu0 0.0
    %94 = vmatpush1.msra.mxu0 0.0
    %95 = vmatprep.subr.mxu0 0.0
    %96 = vmatpush1.msra.mxu0 0.0
    %97 = vmatprep.subr.mxu0 0.0
    %98 = vmatpush1.msra.mxu0 0.0
    %99 = vmatprep.subr.mxu0 0.0
    %100 = vmatpush1.msra.mxu0 0.0
    %101 = vmatprep.subr.mxu0 0.0
    %102 = vmatpush1.msra.mxu0 0.0
    %103 = vmatprep.subr.mxu0 0.0
    %104 = vmatpush1.msra.mxu0 0.0
    %105 = vmatprep.subr.mxu0 0.0
    %106 = vmatpush1.msra.mxu0 0.0
    %107 = vmatprep.subr.mxu0 0.0
    %108 = vmatpush1.msra.mxu0 0.0
    %109 = vmatprep.mubr.f32.mxu0 0.0
    %110 = vmatmul.mubr.f32.gmra.mrb[0].mxu0 %v28
    %v111 = vpop.f32.mrb[0].mxu0
    %v112 = vadd.f32 0.0, %v111
    %v113 = vpop.f32.mrb[0].mxu0
    %114 = vdwg.mxu0
    %v115 = vadd.f32 %v27, %v112
    %116 = vst [vmem:[#allocation2] sm:$0xff] %v115
    // Predicated region
    $region18: #{linear_forward.1} parent=1 // pred_check
      %p117 = pneg %p15
    $region19: #{linear_forward.1} parent=1 // pred_check_branch
      %119 = sbr.rel (%p117) target = $region21
    $region20: #{linear_forward.1} parent=1 // pred_region
      %v120 = vld [vmem:[#allocation2] sm:$0xff]
      %121 = vst [vmem:[#allocation3] sm:$0xff] %v120
    $region21: #{linear_forward.1} parent=1 // pred_fallthru
      _
    // Predicated region
    $region22: #{linear_forward.1} parent=1 // pred_check
      _
    $region23: #{linear_forward.1} parent=1 // pred_check_branch
      %123 = sbr.rel (0) target = $region25
    $region24: #{linear_forward.1} parent=1 // pred_region
      %s125 = ssub.s32 128, 128
      %126 = vsyncadd [#allocation4], %s125
      %s128 = sshll.u32 [#allocation3], 4
      %s129 = int_to_ptr.vmem [resolvable:$true] %s128
      %131 = dma.vmem_to_hbm [thread:$0]  %s129, 128, %s3, [#allocation4]
    $region25: #{linear_forward.1} parent=1 // pred_fallthru
      _
    // Predicated region
    $region26: #{linear_forward.1} parent=1 // pred_check
      _
    $region27: #{linear_forward.1} parent=1 // pred_check_branch
      %133 = sbr.rel (0) target = $region29
    $region28: #{linear_forward.1} parent=1 // pred_region
      %134 = dma.done [#allocation4], 128
    $region29: #{linear_forward.1} parent=1 // pred_fallthru
      _
    %135 = vsyncpa [#allocation4], 1

</llo_original>
